<compile_context>
chip_gen: v7x
topology: tpu7x:2x2x1
jax: 0.10.0
libtpu: 0.0.40
codegen_flags: <defaults>
</compile_context>

<pallas_src>
from functools import partial

import jax
import jax.numpy as jnp
from jax.experimental import pallas as pl
from jax.experimental.pallas import tpu as pltpu


def _bn_prelu_kernel(x_ref, p_ref, o_ref):
    # x_ref: (rt, t)   rows = flattened (n, c), lanes = flattened spatial
    # p_ref: (rt, 3)   per-row [scale, shift, alpha] (float32)
    # o_ref: (rt, t)
    x = x_ref[...].astype(jnp.float32)
    scale = p_ref[:, 0:1]
    shift = p_ref[:, 1:2]
    alpha = p_ref[:, 2:3]
    y = x * scale + shift                                 # folded BatchNorm
    o_ref[...] = jnp.where(y >= 0.0, y, alpha * y).astype(o_ref.dtype)


def _choose_tiles(rows, hw, itemsize):
    """Byte-budgeted (row_tile, lane_tile) for the (rows, hw) layout."""
    LANE = 128
    # sublane packing granularity per dtype width
    sub = 8 if itemsize >= 4 else (16 if itemsize == 2 else 32)
    # ~4 MiB per block -> (in + out) x 2 double buffers ~= 16 MiB resident,
    # which fits every generation's scoped-VMEM limit once raised to 32 MiB.
    target = 4 << 20

    hw_pad = pl.cdiv(hw, LANE) * LANE
    rows_pad = pl.cdiv(rows, sub) * sub

    # Lane tile: cover all of HW if the budget allows at the minimum row tile,
    # otherwise the largest 128-multiple that fits.
    lanes_budget = max(LANE, (target // (sub * itemsize)) // LANE * LANE)
    t = min(hw_pad, lanes_budget)

    # Row tile: grow in sublane multiples up to the byte target.
    rt_budget = max(sub, (target // (t * itemsize)) // sub * sub)
    rt = min(rows_pad, rt_budget)

    # v7x has 2 TensorCores sharing HBM: if the whole problem landed in one
    # block but is big enough to care, split rows so both cores stream.
    n_row_blocks = pl.cdiv(rows_pad, rt)
    n_lane_blocks = pl.cdiv(hw_pad, t)
    if (n_row_blocks * n_lane_blocks == 1 and rows_pad >= 2 * sub
            and rt * t * itemsize >= (2 << 20)):
        rt = pl.cdiv(rows_pad // 2, sub) * sub

    return rt, t


@partial(jax.jit, static_argnames=("eps", "training"))
def bn_prelu(x_nchw, bn_gamma, bn_beta, bn_mean, bn_var, prelu_alpha,
             *, eps=1e-5, training=False):
    n, c, h, w = x_nchw.shape
    hw = h * w
    rows = n * c
    itemsize = jnp.dtype(x_nchw.dtype).itemsize

    # PyTorch PReLU may have num_parameters=1; broadcast to per-channel.
    alpha_c = jnp.broadcast_to(
        prelu_alpha.astype(jnp.float32).reshape(-1), (c,))

    x2 = x_nchw.reshape(rows, hw)          # free reshape of contiguous NCHW

    if training:
        # Batch statistics (biased variance), matching nn.BatchNorm2d train
        # mode.  mean / mean-of-squares with f32 accumulation; under jit the
        # upcast+square fuses into the reductions (no materialized f32 copy).
        x3 = x_nchw.reshape(n, c, hw)
        mean = jnp.mean(x3, axis=(0, 2), dtype=jnp.float32)
        mean_sq = jnp.mean(jnp.square(x3.astype(jnp.float32)), axis=(0, 2))
        var = mean_sq - jnp.square(mean)
    else:
        mean = bn_mean.astype(jnp.float32)
        var = bn_var.astype(jnp.float32)

    # Fold BN into per-channel scale/shift, merge with alpha -> (C, 3),
    # then replicate per batch image -> (N*C, 3) so row r maps to c = r % C.
    scale_c = bn_gamma.astype(jnp.float32) * jax.lax.rsqrt(var + eps)
    shift_c = bn_beta.astype(jnp.float32) - mean * scale_c
    params = jnp.tile(jnp.stack([scale_c, shift_c, alpha_c], axis=-1), (n, 1))

    rt, t = _choose_tiles(rows, hw, itemsize)
    grid = (pl.cdiv(rows, rt), pl.cdiv(hw, t))

    # Explicit scoped-VMEM limit: resident = in+out double-buffered blocks
    # plus the tiny (padded) param blocks; keep <= 48 MiB so it is safe on
    # v7x's 64 MiB physical VMEM while raising v5e/v6e's low defaults.
    block_bytes = rt * t * itemsize
    params_bytes = pl.cdiv(rt, 8) * 8 * 128 * 4
    resident = 4 * block_bytes + 2 * params_bytes
    vmem_limit = int(min(48 << 20, max(32 << 20, resident + (8 << 20))))

    out = pl.pallas_call(
        _bn_prelu_kernel,
        out_shape=jax.ShapeDtypeStruct((rows, hw), x_nchw.dtype),
        grid=grid,
        in_specs=[
            pl.BlockSpec((rt, t), lambda i, j: (i, j)),
            pl.BlockSpec((rt, 3), lambda i, j: (i, 0)),
        ],
        out_specs=pl.BlockSpec((rt, t), lambda i, j: (i, j)),
        compiler_params=pltpu.CompilerParams(
            dimension_semantics=("parallel", "parallel"),
            vmem_limit_bytes=vmem_limit),
    )(x2, params)

    return out.reshape(n, c, h, w)


def _reference(x, gamma, beta, mean, var, alpha, *, eps=1e-5, training=False):
    x = x.astype(jnp.float32)
    if training:
        mean = jnp.mean(x, axis=(0, 2, 3))
        var = jnp.mean(jnp.square(x - mean.reshape(1, -1, 1, 1)),
                       axis=(0, 2, 3))
    y = (x - mean.reshape(1, -1, 1, 1)) / jnp.sqrt(
        var.reshape(1, -1, 1, 1) + eps)
    y = y * gamma.reshape(1, -1, 1, 1) + beta.reshape(1, -1, 1, 1)
    a = jnp.broadcast_to(alpha.reshape(-1), (x.shape[1],)).reshape(1, -1, 1, 1)
    return jnp.where(y >= 0.0, y, a * y)


if __name__ == "__main__":
    key = jax.random.PRNGKey(0)
    k_x, k_g, k_b, k_m, k_v = jax.random.split(key, 5)

    # Small shapes consistent with _BNPReLU(out_channels=4) on 16x16 maps.
    N, C, H, W = 2, 4, 16, 16

    x = jax.random.normal(k_x, (N, C, H, W), jnp.float32)
    bn_gamma = 1.0 + 0.1 * jax.random.normal(k_g, (C,), jnp.float32)
    bn_beta = 0.1 * jax.random.normal(k_b, (C,), jnp.float32)
    bn_mean = 0.1 * jax.random.normal(k_m, (C,), jnp.float32)
    bn_var = jnp.abs(jax.random.normal(k_v, (C,), jnp.float32)) + 0.5
    prelu_alpha = jnp.full((C,), 0.25, jnp.float32)  # PyTorch PReLU default

    # Eval-mode (running stats) — the usual deployment path.
    out = jax.block_until_ready(
        bn_prelu(x, bn_gamma, bn_beta, bn_mean, bn_var, prelu_alpha))
    ref = _reference(x, bn_gamma, bn_beta, bn_mean, bn_var, prelu_alpha)
    assert out.shape == (N, C, H, W)
    assert jnp.allclose(out, ref, rtol=1e-5, atol=1e-5)

    # Train-mode forward (batch statistics computed in the wrapper).
    out_tr = jax.block_until_ready(
        bn_prelu(x, bn_gamma, bn_beta, bn_mean, bn_var, prelu_alpha,
                 training=True))
    ref_tr = _reference(x, bn_gamma, bn_beta, bn_mean, bn_var, prelu_alpha,
                        training=True)
    assert jnp.allclose(out_tr, ref_tr, rtol=1e-5, atol=1e-5)

    print("KERNEL_OK")
</pallas_src>

<mosaic_0001>
module attributes {stable_mosaic.version = 11 : i64} {
  func.func @_bn_prelu_kernel(%arg0: i32, %arg1: i32, %arg2: memref<8x256xf32, #tpu.memory_space<vmem>>, %arg3: memref<8x3xf32, #tpu.memory_space<vmem>>, %arg4: memref<8x256xf32, #tpu.memory_space<vmem>>) attributes {dimension_semantics = [#tpu.dimension_semantics<parallel>, #tpu.dimension_semantics<parallel>], iteration_bounds = array<i64: 1, 1>, scalar_prefetch = 0 : i64, scratch_operands = 0 : i64, tpu.core_type = #tpu.core_type<tc>, window_params = [{transform_indices = @transform_0, window_bounds = array<i64: 8, 256>}, {transform_indices = @transform_1, window_bounds = array<i64: 8, 3>}, {transform_indices = @transform_2, window_bounds = array<i64: 8, 256>}]} {
    %c0 = arith.constant 0 : index
    %c0_0 = arith.constant 0 : index
    %0 = vector.load %arg2[%c0, %c0_0] : memref<8x256xf32, #tpu.memory_space<vmem>>, vector<8x256xf32>
    %c0_1 = arith.constant 0 : index
    %c0_2 = arith.constant 0 : index
    %1 = vector.load %arg3[%c0_1, %c0_2] : memref<8x3xf32, #tpu.memory_space<vmem>>, vector<8x1xf32>
    %c0_3 = arith.constant 0 : index
    %c1 = arith.constant 1 : index
    %2 = vector.load %arg3[%c0_3, %c1] : memref<8x3xf32, #tpu.memory_space<vmem>>, vector<8x1xf32>
    %c0_4 = arith.constant 0 : index
    %c2 = arith.constant 2 : index
    %3 = vector.load %arg3[%c0_4, %c2] : memref<8x3xf32, #tpu.memory_space<vmem>>, vector<8x1xf32>
    %4 = vector.broadcast %1 : vector<8x1xf32> to vector<8x256xf32>
    %5 = arith.mulf %0, %4 : vector<8x256xf32>
    %6 = vector.broadcast %2 : vector<8x1xf32> to vector<8x256xf32>
    %7 = arith.addf %5, %6 : vector<8x256xf32>
    %cst = arith.constant 0.000000e+00 : f32
    %8 = vector.broadcast %cst : f32 to vector<8x256xf32>
    %9 = arith.cmpf oge, %7, %8 : vector<8x256xf32>
    %10 = vector.broadcast %3 : vector<8x1xf32> to vector<8x256xf32>
    %11 = arith.mulf %10, %7 : vector<8x256xf32>
    %12 = arith.select %9, %7, %11 : vector<8x256xi1>, vector<8x256xf32>
    %c0_5 = arith.constant 0 : index
    %c0_6 = arith.constant 0 : index
    %13 = vector.load %arg4[%c0_5, %c0_6] : memref<8x256xf32, #tpu.memory_space<vmem>>, vector<8x256xf32>
    tpu.vector_store %arg4[%c0_5, %c0_6], %12 {strides = array<i32>} : memref<8x256xf32, #tpu.memory_space<vmem>>, vector<8x256xf32>,
    return
  }
  func.func @transform_0(%arg0: i32, %arg1: i32) -> (i32, i32) {
    %c0_i32 = arith.constant 0 : i32
    return %arg0, %arg1 : i32, i32
  }
  func.func @transform_1(%arg0: i32, %arg1: i32) -> (i32, i32) {
    %c0_i32 = arith.constant 0 : i32
    %c0_i32_0 = arith.constant 0 : i32
    return %arg0, %c0_i32 : i32, i32
  }
  func.func @transform_2(%arg0: i32, %arg1: i32) -> (i32, i32) {
    %c0_i32 = arith.constant 0 : i32
    return %arg0, %arg1 : i32, i32
  }
}

</mosaic_0001>

<llo_original>
// kernel: bn_prelu.1
$region0: #{bn_prelu.1}
  #allocation0 [shape = 'u32[]', space=smem, size = 0x4, offset = 0x4, fixed_abs, tag = 'smem constant byte address 0x4 - core index']
  #allocation1 [shape = 'u32[144,128]{1,0:T(1,128)}', space=vmem, size = 0x12000, scoped, tag = 'internal scratch']
  %s0 = inlined_call_operand.vmem [shape: f32[8,256], index: 0, kind: input, shape index: {}]
  %s1 = inlined_call_operand.vmem [shape: f32[8,3], index: 1, kind: input, shape index: {}]
  %s2 = inlined_call_operand.vmem [shape: f32[8,256], index: 2, kind: output, shape index: {}]
  %s3 = sld [smem:[#allocation0]]
  $region18: #{bn_prelu.1} parent=0
    _
  %s5 = ssub.s32 1, %s3
  %s6 = scalar_select 0, %s5, %s3
  // Predicated region
  $region2: #{bn_prelu.1} parent=0 // pred_check
    _
  $region3: #{bn_prelu.1} parent=0 // pred_check_branch
    %8 = sbr.rel (0) target = $region5
  $region4: #{bn_prelu.1} parent=0 // pred_region
    _
  $region5: #{bn_prelu.1} parent=0 // pred_fallthru
    _
  // Predicated region
  $region6: #{bn_prelu.1} parent=0 // pred_check
    _
  $region7: #{bn_prelu.1} parent=0 // pred_check_branch
    %10 = sbr.rel (0) target = $region9
  $region8: #{bn_prelu.1} parent=0 // pred_region
    _
  $region9: #{bn_prelu.1} parent=0 // pred_fallthru
    _
  %v11 = vld [vmem:[%s0] sm:$0xff]
  %v12 = vld [vmem:[%s0 + $0x8] sm:$0xff]
  %v13 = vld [vmem:[%s1] sm:$0xff]
  %15 = vset.pattern.permute.xlu0 0
  %16 = vperm.xlu0 %15, %v13
  %v17 = vpop.permute.xlu0 %16
  %v19 = vmul.f32 %v11, %v17
  %v20 = vmul.f32 %v12, %v17
  %21 = vset.pattern.permute.xlu0 1
  %22 = vperm.xlu0 %21, %v13
  %v23 = vpop.permute.xlu0 %22
  %v25 = vadd.f32 %v19, %v23
  %v26 = vadd.f32 %v20, %v23
  %vm27 = vcmp.ge.f32.partialorder %v25, 0.0
  %vm28 = vcmp.ge.f32.partialorder %v26, 0.0
  %29 = vset.pattern.permute.xlu0 2
  %30 = vperm.xlu0 %29, %v13
  %v31 = vpop.permute.xlu0 %30
  %v33 = vmul.f32 %v31, %v25
  %v34 = vmul.f32 %v31, %v26
  %v35 = vsel %vm27, %v25, %v33
  %v36 = vsel %vm28, %v26, %v34
  %37 = vst [vmem:[%s2] sm:$0xff] %v35
  %38 = vst [vmem:[%s2 + $0x8] sm:$0xff] %v36
  // Predicated region
  $region10: #{bn_prelu.1} parent=0 // pred_check
    _
  $region11: #{bn_prelu.1} parent=0 // pred_check_branch
    %40 = sbr.rel (0) target = $region13
  $region12: #{bn_prelu.1} parent=0 // pred_region
    _
  $region13: #{bn_prelu.1} parent=0 // pred_fallthru
    _
  // Predicated region
  $region14: #{bn_prelu.1} parent=0 // pred_check
    _
  $region15: #{bn_prelu.1} parent=0 // pred_check_branch
    %42 = sbr.rel (0) target = $region17
  $region16: #{bn_prelu.1} parent=0 // pred_region
    _
  $region17: #{bn_prelu.1} parent=0 // pred_fallthru
    _

</llo_original>
